<compile_context>
chip_gen: v6e
topology: v6e:2x2x1
jax: 0.10.0
libtpu: 0.0.40
codegen_flags: <defaults>
</compile_context>

<pallas_src>
import functools

import jax
import jax.numpy as jnp
from jax import lax
from jax.experimental import pallas as pl
from jax.experimental.pallas import tpu as pltpu


# ----------------------------- Pallas kernel -------------------------------

def _margin_ranking_kernel(im_ref, s_ref, out_ref, *, margin, direction,
                           max_violation, cost_style, eps=1e-13):
    im = im_ref[...].astype(jnp.float32)   # (B, H)
    s = s_ref[...].astype(jnp.float32)     # (B, H)

    # --- fused producer: cosine_sim(im, s) = l2norm(im) @ l2norm(s).T -------
    im_norm = jnp.sqrt(jnp.sum(im * im, axis=1, keepdims=True)) + eps + 1e-14
    s_norm = jnp.sqrt(jnp.sum(s * s, axis=1, keepdims=True)) + eps + 1e-14
    im_n = im / im_norm
    s_n = s / s_norm
    # contract over hidden dim directly (no explicit transpose of s_n)
    scores = lax.dot_general(
        im_n, s_n, (((1,), (1,)), ((), ())),
        preferred_element_type=jnp.float32,
        precision=lax.Precision.HIGHEST)                     # (B, B)

    B = scores.shape[0]
    row_ids = lax.broadcasted_iota(jnp.int32, (B, B), 0)
    col_ids = lax.broadcasted_iota(jnp.int32, (B, B), 1)
    eye = row_ids == col_ids

    diag_only = jnp.where(eye, scores, 0.0)
    d1 = jnp.sum(diag_only, axis=1, keepdims=True)   # (B, 1): diag[i] per row
    d2 = jnp.sum(diag_only, axis=0, keepdims=True)   # (1, B): diag[j] per col

    total = jnp.float32(0.0)

    if direction in ("i2t", "bidir"):
        cost_s = jnp.maximum(margin + scores - d1, 0.0)
        cost_s = jnp.where(eye, 0.0, cost_s)
        if max_violation:
            cost_s = jnp.max(cost_s, axis=1, keepdims=True)
        part = jnp.sum(cost_s)
        if cost_style == "mean":
            part = part / jnp.float32(cost_s.size)
        total = total + part

    if direction in ("t2i", "bidir"):
        cost_im = jnp.maximum(margin + scores - d2, 0.0)
        cost_im = jnp.where(eye, 0.0, cost_im)
        if max_violation:
            cost_im = jnp.max(cost_im, axis=0, keepdims=True)
        part = jnp.sum(cost_im)
        if cost_style == "mean":
            part = part / jnp.float32(cost_im.size)
        total = total + part

    out_ref[0, 0] = total


# ------------------------------ Python wrapper ------------------------------

def margin_ranking_loss(s, im, *, margin=0.0, measure="cosine",
                        max_violation=False, cost_style="sum",
                        direction="bidir"):
    """Pallas implementation of MarginRankingLoss.forward(s, im).

    s, im: (batch, hidden) embedding arrays.  Returns a float32 scalar.
    """
    # TODO(synk): measure='hist' (hist_sim / extended-Jaccard) not implemented.
    assert measure == "cosine", "only measure='cosine' is implemented"
    # TODO(synk): optional per-sample `weight` argument of the reference
    # forward is not supported (weight=None path only).
    assert s.ndim == 2 and im.ndim == 2
    assert s.shape == im.shape and s.shape[0] == im.shape[0]

    kernel = functools.partial(
        _margin_ranking_kernel,
        margin=float(margin),
        direction=direction,
        max_violation=bool(max_violation),
        cost_style=cost_style,
    )

    out = pl.pallas_call(
        kernel,
        out_shape=jax.ShapeDtypeStruct((1, 1), jnp.float32),
        # Full-array single block (block_shape == array shape), no grid:
        # embeddings are small, everything fits in one VMEM tile.
        in_specs=[
            pl.BlockSpec(im.shape, lambda: (0, 0)),
            pl.BlockSpec(s.shape, lambda: (0, 0)),
        ],
        # Scalar result goes to SMEM: avoids a padded (8,128) VMEM tile,
        # the masked partial store, and the output writeback DMA.
        out_specs=pl.BlockSpec(memory_space=pltpu.MemorySpace.SMEM),
    )(im, s)
    return out[0, 0]


# ----------------------- plain-JAX reference (checking) ---------------------

def _l2norm_ref(x, eps=1e-13, dim=1):
    norm = jnp.sqrt(jnp.sum(x * x, axis=dim, keepdims=True)) + eps + 1e-14
    return x / norm


def _reference_loss(s, im, *, margin=0.0, max_violation=False,
                    cost_style="sum", direction="bidir"):
    scores = jnp.matmul(_l2norm_ref(im), _l2norm_ref(s).T,
                        precision=lax.Precision.HIGHEST)
    B = scores.shape[0]
    diag = jnp.diagonal(scores).reshape(B, 1)
    eye = jnp.eye(B, dtype=bool)
    total = jnp.float32(0.0)
    if direction in ("i2t", "bidir"):
        cost_s = jnp.maximum(margin + scores - diag, 0.0)       # d1 = diag[i]
        cost_s = jnp.where(eye, 0.0, cost_s)
        if max_violation:
            cost_s = jnp.max(cost_s, axis=1)
        total = total + (jnp.sum(cost_s) if cost_style == "sum"
                         else jnp.mean(cost_s))
    if direction in ("t2i", "bidir"):
        cost_im = jnp.maximum(margin + scores - diag.T, 0.0)    # d2 = diag[j]
        cost_im = jnp.where(eye, 0.0, cost_im)
        if max_violation:
            cost_im = jnp.max(cost_im, axis=0)
        total = total + (jnp.sum(cost_im) if cost_style == "sum"
                         else jnp.mean(cost_im))
    return total


# --------------------------------- driver -----------------------------------

if __name__ == "__main__":
    key = jax.random.PRNGKey(0)
    k1, k2 = jax.random.split(key)

    batch, hidden = 8, 32
    s = jax.random.normal(k1, (batch, hidden), dtype=jnp.float32)
    im = jax.random.normal(k2, (batch, hidden), dtype=jnp.float32)

    configs = [
        dict(margin=0.2, max_violation=False, cost_style="sum", direction="bidir"),
        dict(margin=0.1, max_violation=True, cost_style="sum", direction="bidir"),
        dict(margin=0.2, max_violation=False, cost_style="mean", direction="i2t"),
        dict(margin=0.05, max_violation=True, cost_style="mean", direction="t2i"),
    ]

    for cfg in configs:
        got = jax.block_until_ready(margin_ranking_loss(s, im, **cfg))
        want = jax.block_until_ready(_reference_loss(s, im, **cfg))
        assert jnp.allclose(got, want, atol=1e-4, rtol=1e-5), (cfg, got, want)

    print("KERNEL_OK")
</pallas_src>

<mosaic_0001>
module attributes {stable_mosaic.version = 11 : i64} {
  func.func @_margin_ranking_kernel(%arg0: memref<8x32xf32, #tpu.memory_space<vmem>>, %arg1: memref<8x32xf32, #tpu.memory_space<vmem>>, %arg2: memref<1x1xf32, #tpu.memory_space<smem>>) attributes {dimension_semantics = [], scalar_prefetch = 0 : i64, scratch_operands = 0 : i64, tpu.core_type = #tpu.core_type<tc>} {
    %c0 = arith.constant 0 : index
    %c0_0 = arith.constant 0 : index
    %0 = vector.load %arg0[%c0, %c0_0] : memref<8x32xf32, #tpu.memory_space<vmem>>, vector<8x32xf32>
    %c0_1 = arith.constant 0 : index
    %c0_2 = arith.constant 0 : index
    %1 = vector.load %arg1[%c0_1, %c0_2] : memref<8x32xf32, #tpu.memory_space<vmem>>, vector<8x32xf32>
    %2 = arith.mulf %0, %0 : vector<8x32xf32>
    %cst = arith.constant dense<0.000000e+00> : vector<8xf32>
    %3 = vector.multi_reduction <add>, %2, %cst [1] : vector<8x32xf32> to vector<8xf32>
    %4 = vector.shape_cast %3 : vector<8xf32> to vector<8x1xf32>
    %5 = math.sqrt %4 : vector<8x1xf32>
    %cst_3 = arith.constant 9.99999982E-14 : f32
    %6 = vector.broadcast %cst_3 : f32 to vector<8x1xf32>
    %7 = arith.addf %5, %6 : vector<8x1xf32>
    %cst_4 = arith.constant 9.99999982E-15 : f32
    %8 = vector.broadcast %cst_4 : f32 to vector<8x1xf32>
    %9 = arith.addf %7, %8 : vector<8x1xf32>
    %10 = arith.mulf %1, %1 : vector<8x32xf32>
    %cst_5 = arith.constant dense<0.000000e+00> : vector<8xf32>
    %11 = vector.multi_reduction <add>, %10, %cst_5 [1] : vector<8x32xf32> to vector<8xf32>
    %12 = vector.shape_cast %11 : vector<8xf32> to vector<8x1xf32>
    %13 = math.sqrt %12 : vector<8x1xf32>
    %cst_6 = arith.constant 9.99999982E-14 : f32
    %14 = vector.broadcast %cst_6 : f32 to vector<8x1xf32>
    %15 = arith.addf %13, %14 : vector<8x1xf32>
    %cst_7 = arith.constant 9.99999982E-15 : f32
    %16 = vector.broadcast %cst_7 : f32 to vector<8x1xf32>
    %17 = arith.addf %15, %16 : vector<8x1xf32>
    %18 = vector.broadcast %9 : vector<8x1xf32> to vector<8x32xf32>
    %19 = arith.divf %0, %18 : vector<8x32xf32>
    %20 = vector.broadcast %17 : vector<8x1xf32> to vector<8x32xf32>
    %21 = arith.divf %1, %20 : vector<8x32xf32>
    %cst_8 = arith.constant dense<0.000000e+00> : vector<8x8xf32>
    %22 = tpu.matmul %19, %21, %cst_8 {dimension_numbers = #tpu.dot_dimension_numbers<[1], [1], [0], [0], [0, 0, 1, 0], [], []>, precision = #tpu.contract_precision<fp32>} : vector<8x32xf32>, vector<8x32xf32>, vector<8x8xf32> -> vector<8x8xf32>
    %23 = tpu.iota {dimensions = array<i32: 0>} : vector<8x8xi32>
    %24 = tpu.iota {dimensions = array<i32: 1>} : vector<8x8xi32>
    %25 = arith.cmpi eq, %23, %24 : vector<8x8xi32>
    %cst_9 = arith.constant 0.000000e+00 : f32
    %26 = vector.broadcast %cst_9 : f32 to vector<8x8xf32>
    %27 = arith.select %25, %22, %26 : vector<8x8xi1>, vector<8x8xf32>
    %cst_10 = arith.constant dense<0.000000e+00> : vector<8xf32>
    %28 = vector.multi_reduction <add>, %27, %cst_10 [1] : vector<8x8xf32> to vector<8xf32>
    %29 = vector.shape_cast %28 : vector<8xf32> to vector<8x1xf32>
    %cst_11 = arith.constant dense<0.000000e+00> : vector<8xf32>
    %30 = vector.multi_reduction <add>, %27, %cst_11 [0] : vector<8x8xf32> to vector<8xf32>
    %31 = vector.shape_cast %30 : vector<8xf32> to vector<1x8xf32>
    %cst_12 = arith.constant 2.000000e-01 : f32
    %32 = vector.broadcast %cst_12 : f32 to vector<8x8xf32>
    %33 = arith.addf %32, %22 : vector<8x8xf32>
    %34 = vector.broadcast %29 : vector<8x1xf32> to vector<8x8xf32>
    %35 = arith.subf %33, %34 : vector<8x8xf32>
    %cst_13 = arith.constant 0.000000e+00 : f32
    %36 = vector.broadcast %cst_13 : f32 to vector<8x8xf32>
    %37 = arith.maximumf %35, %36 : vector<8x8xf32>
    %cst_14 = arith.constant 0.000000e+00 : f32
    %38 = vector.broadcast %cst_14 : f32 to vector<8x8xf32>
    %39 = arith.select %25, %38, %37 : vector<8x8xi1>, vector<8x8xf32>
    %40 = vector.shape_cast %39 : vector<8x8xf32> to vector<1x8x8xf32>
    %cst_15 = arith.constant dense<0.000000e+00> : vector<1xf32>
    %41 = vector.multi_reduction <add>, %40, %cst_15 [1, 2] : vector<1x8x8xf32> to vector<1xf32>
    %42 = vector.shape_cast %41 : vector<1xf32> to vector<1x1x1xf32>
    %43 = vector.extract %42[0, 0, 0] : f32 from vector<1x1x1xf32>
    %cst_16 = arith.constant 0.000000e+00 : f32
    %44 = arith.addf %cst_16, %43 : f32
    %cst_17 = arith.constant 2.000000e-01 : f32
    %45 = vector.broadcast %cst_17 : f32 to vector<8x8xf32>
    %46 = arith.addf %45, %22 : vector<8x8xf32>
    %47 = vector.broadcast %31 : vector<1x8xf32> to vector<8x8xf32>
    %48 = arith.subf %46, %47 : vector<8x8xf32>
    %cst_18 = arith.constant 0.000000e+00 : f32
    %49 = vector.broadcast %cst_18 : f32 to vector<8x8xf32>
    %50 = arith.maximumf %48, %49 : vector<8x8xf32>
    %cst_19 = arith.constant 0.000000e+00 : f32
    %51 = vector.broadcast %cst_19 : f32 to vector<8x8xf32>
    %52 = arith.select %25, %51, %50 : vector<8x8xi1>, vector<8x8xf32>
    %53 = vector.shape_cast %52 : vector<8x8xf32> to vector<1x8x8xf32>
    %cst_20 = arith.constant dense<0.000000e+00> : vector<1xf32>
    %54 = vector.multi_reduction <add>, %53, %cst_20 [1, 2] : vector<1x8x8xf32> to vector<1xf32>
    %55 = vector.shape_cast %54 : vector<1xf32> to vector<1x1x1xf32>
    %56 = vector.extract %55[0, 0, 0] : f32 from vector<1x1x1xf32>
    %57 = arith.addf %44, %56 : f32
    %c0_21 = arith.constant 0 : index
    %c0_22 = arith.constant 0 : index
    %58 = memref.load %arg2[%c0_21, %c0_22] : memref<1x1xf32, #tpu.memory_space<smem>>
    memref.store %57, %arg2[%c0_21, %c0_22] : memref<1x1xf32, #tpu.memory_space<smem>>
    return
  }
}

</mosaic_0001>

<llo_original>
// kernel: tpu_custom_call.1
$region0: #{tpu_custom_call.1}
  #allocation0 [shape = 'u32[]', space=smem, size = 0x4, offset = 0x4, fixed_abs, tag = 'smem constant byte address 0x4 - core index']
  #allocation1 [shape = 'u32[144,128]{1,0:T(1,128)}', space=vmem, size = 0x12000, scoped, tag = 'internal scratch']
  %s0 = inlined_call_operand.hbm [shape: f32[8,32], index: 0, kind: input, shape index: {}]
  %s1 = inlined_call_operand.hbm [shape: f32[8,32], index: 1, kind: input, shape index: {}]
  %s2 = inlined_call_operand.hbm [shape: f32[1,1], index: 2, kind: output, shape index: {}]
  %s3 = sld [smem:[#allocation0]]
  $region26: #{tpu_custom_call.1} parent=0
    _
  %s5 = ssub.s32 1, %s3
  %s6 = scalar_select 0, %s5, %s3
  $region1: #{tpu_custom_call.1} parent=0
    #allocation2 [shape = 'u8[4096]{0}', space=vmem, size = 0x1000, scoped, tag = 'input window, operand 0, single buffered']
    #allocation3 [shape = 's32[1]{0}', space=sflag, size = 0x4, scoped, tag = 'scoped memory for tpu_custom_call.1']
    #allocation4 [shape = 's32[1]{0}', space=sflag, size = 0x4, scoped, tag = 'scoped memory for tpu_custom_call.1']
    #allocation5 [shape = 'u8[4096]{0}', space=vmem, size = 0x1000, scoped, tag = 'input window, operand 1, single buffered']
    #allocation6 [shape = 's32[1]{0}', space=sflag, size = 0x4, scoped, tag = 'scoped memory for tpu_custom_call.1']
    #allocation7 [shape = 'u8[512]{0}', space=smem, size = 0x200, scoped, tag = 'output window, operand 0, single buffered']
    %7 = vsyncpa [#allocation3], 0
    %8 = vsyncpa [#allocation6], 0
    %9 = vsyncpa [#allocation4], 0
    // Predicated region
    $region2: #{tpu_custom_call.1} parent=1 // pred_check
      _
    $region3: #{tpu_custom_call.1} parent=1 // pred_check_branch
      %11 = sbr.rel (0) target = $region5
    $region4: #{tpu_custom_call.1} parent=1 // pred_region
      %s13 = ssub.s32 128, 128
      %14 = vsyncadd [#allocation3], %s13
      %s16 = sshll.u32 [#allocation2], 4
      %s17 = int_to_ptr.vmem [resolvable:$true] %s16
      %19 = dma.hbm_to_vmem [thread:$0]  %s0, 128, %s17, [#allocation3]
    $region5: #{tpu_custom_call.1} parent=1 // pred_fallthru
      _
    // Predicated region
    $region6: #{tpu_custom_call.1} parent=1 // pred_check
      _
    $region7: #{tpu_custom_call.1} parent=1 // pred_check_branch
      %21 = sbr.rel (0) target = $region9
    $region8: #{tpu_custom_call.1} parent=1 // pred_region
      %s23 = ssub.s32 128, 128
      %24 = vsyncadd [#allocation6], %s23
      %s26 = sshll.u32 [#allocation5], 4
      %s27 = int_to_ptr.vmem [resolvable:$true] %s26
      %29 = dma.hbm_to_vmem [thread:$0]  %s1, 128, %s27, [#allocation6]
    $region9: #{tpu_custom_call.1} parent=1 // pred_fallthru
      _
    // Predicated region
    $region10: #{tpu_custom_call.1} parent=1 // pred_check
      _
    $region11: #{tpu_custom_call.1} parent=1 // pred_check_branch
      %31 = sbr.rel (0) target = $region13
    $region12: #{tpu_custom_call.1} parent=1 // pred_region
      %32 = dma.done [#allocation3], 128
    $region13: #{tpu_custom_call.1} parent=1 // pred_fallthru
      _
    // Predicated region
    $region14: #{tpu_custom_call.1} parent=1 // pred_check
      _
    $region15: #{tpu_custom_call.1} parent=1 // pred_check_branch
      %34 = sbr.rel (0) target = $region17
    $region16: #{tpu_custom_call.1} parent=1 // pred_region
      %35 = dma.done [#allocation6], 128
    $region17: #{tpu_custom_call.1} parent=1 // pred_fallthru
      _
    %v36 = vld [vmem:[#allocation2] sm:$0xff]
    %v37 = vld [vmem:[#allocation5] sm:$0xff]
    %v38 = vmul.f32 %v36, %v36
    %vm39 = vcmask 261120
    %v40 = vsel %vm39, %v38, 0.0
    %41 = vadd.xlane.f32.xlu0 %v40
    %v42 = vpop.xlane.xlu0 %41
    %v43 = vrsqrt.pop %v42
    %v44 = vmul.f32 %v42, %v43
    %vm45 = vcmp.eq.f32.partialorder %v42, inf
    %v46 = vsel %vm45, %v42, %v44
    %vm47 = vcmp.eq.f32.partialorder %v42, 0.0
    %v48 = vand.u32 %v42, 2147483648
    %v49 = vsel %vm47, %v48, %v46
    %v50 = vadd.f32 %v49, 1e-13
    %v51 = vadd.f32 %v50, 1e-14
    %v52 = vmul.f32 %v37, %v37
    %v53 = vsel %vm39, %v52, 0.0
    %54 = vadd.xlane.f32.xlu0 %v53
    %v55 = vpop.xlane.xlu0 %54
    %v56 = vrsqrt.pop %v55
    %v57 = vmul.f32 %v55, %v56
    %vm58 = vcmp.eq.f32.partialorder %v55, inf
    %v59 = vsel %vm58, %v55, %v57
    %vm60 = vcmp.eq.f32.partialorder %v55, 0.0
    %v61 = vand.u32 %v55, 2147483648
    %v62 = vsel %vm60, %v61, %v59
    %v63 = vadd.f32 %v62, 1e-13
    %v64 = vadd.f32 %v63, 1e-14
    %v65 = vrcp.pop %v51
    %v66 = vmul.f32 %v36, %v65
    %v67 = vrcp.pop %v64
    %v68 = vmul.f32 %v37, %v67
    %v70 = vsel %vm39, %v66, 0
    %v73 = vsel %vm39, %v68, 0
    %75 = vmatprep.subr.mxu0 0.0
    %76 = vmatpush1.xpose.msra.mxu0 0.0
    %77 = vmatprep.subr.mxu0 0.0
    %78 = vmatpush1.xpose.msra.mxu0 0.0
    %79 = vmatprep.subr.mxu0 0.0
    %80 = vmatpush1.xpose.msra.mxu0 0.0
    %81 = vmatprep.subr.mxu0 0.0
    %82 = vmatpush1.xpose.msra.mxu0 0.0
    %83 = vmatprep.subr.mxu0 0.0
    %84 = vmatpush1.xpose.msra.mxu0 0.0
    %85 = vmatprep.subr.mxu0 0.0
    %86 = vmatpush1.xpose.msra.mxu0 0.0
    %87 = vmatprep.subr.mxu0 0.0
    %88 = vmatpush1.xpose.msra.mxu0 0.0
    %89 = vmatprep.subr.mxu0 0.0
    %90 = vmatpush1.xpose.msra.mxu0 0.0
    %91 = vmatprep.subr.mxu0 0.0
    %92 = vmatpush1.xpose.msra.mxu0 0.0
    %93 = vmatprep.subr.mxu0 0.0
    %94 = vmatpush1.xpose.msra.mxu0 0.0
    %95 = vmatprep.subr.mxu0 0.0
    %96 = vmatpush1.xpose.msra.mxu0 0.0
    %97 = vmatprep.subr.mxu0 0.0
    %98 = vmatpush1.xpose.msra.mxu0 0.0
    %99 = vmatprep.subr.mxu0 0.0
    %100 = vmatpush1.xpose.msra.mxu0 0.0
    %101 = vmatprep.subr.mxu0 0.0
    %102 = vmatpush1.xpose.msra.mxu0 0.0
    %103 = vmatprep.subr.mxu0 0.0
    %104 = vmatpush1.xpose.msra.mxu0 0.0
    %105 = vmatprep.subr.mxu0 0.0
    %v106 = vand.u32 %v73, 4294901760
    %107 = vmatpush1.xpose.msra.mxu0 %v106
    %108 = vmatprep.subr.mxu0 0.0
    %109 = vmatpush2.xpose.msra.mxu0 0.0
    %110 = vmatprep.subr.mxu0 0.0
    %111 = vmatpush2.xpose.msra.mxu0 0.0
    %112 = vmatprep.subr.mxu0 0.0
    %113 = vmatpush2.xpose.msra.mxu0 0.0
    %114 = vmatprep.subr.mxu0 0.0
    %115 = vmatpush2.xpose.msra.mxu0 0.0
    %116 = vmatprep.subr.mxu0 0.0
    %117 = vmatpush2.xpose.msra.mxu0 0.0
    %118 = vmatprep.subr.mxu0 0.0
    %119 = vmatpush2.xpose.msra.mxu0 0.0
    %120 = vmatprep.subr.mxu0 0.0
    %121 = vmatpush2.xpose.msra.mxu0 0.0
    %122 = vmatprep.subr.mxu0 0.0
    %123 = vmatpush2.xpose.msra.mxu0 0.0
    %124 = vmatprep.subr.mxu0 0.0
    %125 = vmatpush2.xpose.msra.mxu0 0.0
    %126 = vmatprep.subr.mxu0 0.0
    %127 = vmatpush2.xpose.msra.mxu0 0.0
    %128 = vmatprep.subr.mxu0 0.0
    %129 = vmatpush2.xpose.msra.mxu0 0.0
    %130 = vmatprep.subr.mxu0 0.0
    %131 = vmatpush2.xpose.msra.mxu0 0.0
    %132 = vmatprep.subr.mxu0 0.0
    %133 = vmatpush2.xpose.msra.mxu0 0.0
    %134 = vmatprep.subr.mxu0 0.0
    %135 = vmatpush2.xpose.msra.mxu0 0.0
    %136 = vmatprep.subr.mxu0 0.0
    %137 = vmatpush2.xpose.msra.mxu0 0.0
    %138 = vmatprep.subr.mxu0 0.0
    %139 = vmatpush2.xpose.msra.mxu0 0.0
    %140 = vmatprep.mubr.f32.mxu0 0.0
    %v141 = vand.u32 %v70, 4294901760
    %v142 = vsub.f32 %v70, %v141
    %v143 = vand.u32 %v142, 4294901760
    %v144 = vsub.f32 %v142, %v143
    %v145 = vand.u32 %v144, 4294901760
    %146 = vmatmul.mubr.f32.gmra.mxu0 %v145
    %v147 = vpop.f32.mrf.mxu0
    %v148 = vadd.f32 0.0, %v147
    %v149 = vpop.f32.mrf.mxu0
    %150 = vdwg.mxu0
    %151 = vmatprep.subr.mxu0 0.0
    %152 = vmatpush1.xpose.msra.mxu0 0.0
    %153 = vmatprep.subr.mxu0 0.0
    %154 = vmatpush1.xpose.msra.mxu0 0.0
    %155 = vmatprep.subr.mxu0 0.0
    %156 = vmatpush1.xpose.msra.mxu0 0.0
    %157 = vmatprep.subr.mxu0 0.0
    %158 = vmatpush1.xpose.msra.mxu0 0.0
    %159 = vmatprep.subr.mxu0 0.0
    %160 = vmatpush1.xpose.msra.mxu0 0.0
    %161 = vmatprep.subr.mxu0 0.0
    %162 = vmatpush1.xpose.msra.mxu0 0.0
    %163 = vmatprep.subr.mxu0 0.0
    %164 = vmatpush1.xpose.msra.mxu0 0.0
    %165 = vmatprep.subr.mxu0 0.0
    %166 = vmatpush1.xpose.msra.mxu0 0.0
    %167 = vmatprep.subr.mxu0 0.0
    %168 = vmatpush1.xpose.msra.mxu0 0.0
    %169 = vmatprep.subr.mxu0 0.0
    %170 = vmatpush1.xpose.msra.mxu0 0.0
    %171 = vmatprep.subr.mxu0 0.0
    %172 = vmatpush1.xpose.msra.mxu0 0.0
    %173 = vmatprep.subr.mxu0 0.0
    %174 = vmatpush1.xpose.msra.mxu0 0.0
    %175 = vmatprep.subr.mxu0 0.0
    %176 = vmatpush1.xpose.msra.mxu0 0.0
    %177 = vmatprep.subr.mxu0 0.0
    %178 = vmatpush1.xpose.msra.mxu0 0.0
    %179 = vmatprep.subr.mxu0 0.0
    %180 = vmatpush1.xpose.msra.mxu0 0.0
    %181 = vmatprep.subr.mxu0 0.0
    %v182 = vand.u32 %v73, 4294901760
    %v183 = vsub.f32 %v73, %v182
    %v184 = vand.u32 %v183, 4294901760
    %v185 = vsub.f32 %v183, %v184
    %v186 = vand.u32 %v185, 4294901760
    %187 = vmatpush1.xpose.msra.mxu0 %v186
    %188 = vmatprep.subr.mxu0 0.0
    %189 = vmatpush2.xpose.msra.mxu0 0.0
    %190 = vmatprep.subr.mxu0 0.0
    %191 = vmatpush2.xpose.msra.mxu0 0.0
    %192 = vmatprep.subr.mxu0 0.0
    %193 = vmatpush2.xpose.msra.mxu0 0.0
    %194 = vmatprep.subr.mxu0 0.0
    %195 = vmatpush2.xpose.msra.mxu0 0.0
    %196 = vmatprep.subr.mxu0 0.0
    %197 = vmatpush2.xpose.msra.mxu0 0.0
    %198 = vmatprep.subr.mxu0 0.0
    %199 = vmatpush2.xpose.msra.mxu0 0.0
    %200 = vmatprep.subr.mxu0 0.0
    %201 = vmatpush2.xpose.msra.mxu0 0.0
    %202 = vmatprep.subr.mxu0 0.0
    %203 = vmatpush2.xpose.msra.mxu0 0.0
    %204 = vmatprep.subr.mxu0 0.0
    %205 = vmatpush2.xpose.msra.mxu0 0.0
    %206 = vmatprep.subr.mxu0 0.0
    %207 = vmatpush2.xpose.msra.mxu0 0.0
    %208 = vmatprep.subr.mxu0 0.0
    %209 = vmatpush2.xpose.msra.mxu0 0.0
    %210 = vmatprep.subr.mxu0 0.0
    %211 = vmatpush2.xpose.msra.mxu0 0.0
    %212 = vmatprep.subr.mxu0 0.0
    %213 = vmatpush2.xpose.msra.mxu0 0.0
    %214 = vmatprep.subr.mxu0 0.0
    %215 = vmatpush2.xpose.msra.mxu0 0.0
    %216 = vmatprep.subr.mxu0 0.0
    %217 = vmatpush2.xpose.msra.mxu0 0.0
    %218 = vmatprep.subr.mxu0 0.0
    %219 = vmatpush2.xpose.msra.mxu0 0.0
    %220 = vmatprep.mubr.f32.mxu0 0.0
    %v221 = vand.u32 %v70, 4294901760
    %222 = vmatmul.mubr.f32.gmra.mxu0 %v221
    %v223 = vpop.f32.mrf.mxu0
    %v224 = vadd.f32 %v148, %v223
    %v225 = vpop.f32.mrf.mxu0
    %226 = vdwg.mxu0
    %227 = vmatprep.subr.mxu0 0.0
    %228 = vmatpush1.xpose.msra.mxu0 0.0
    %229 = vmatprep.subr.mxu0 0.0
    %230 = vmatpush1.xpose.msra.mxu0 0.0
    %231 = vmatprep.subr.mxu0 0.0
    %232 = vmatpush1.xpose.msra.mxu0 0.0
    %233 = vmatprep.subr.mxu0 0.0
    %234 = vmatpush1.xpose.msra.mxu0 0.0
    %235 = vmatprep.subr.mxu0 0.0
    %236 = vmatpush1.xpose.msra.mxu0 0.0
    %237 = vmatprep.subr.mxu0 0.0
    %238 = vmatpush1.xpose.msra.mxu0 0.0
    %239 = vmatprep.subr.mxu0 0.0
    %240 = vmatpush1.xpose.msra.mxu0 0.0
    %241 = vmatprep.subr.mxu0 0.0
    %242 = vmatpush1.xpose.msra.mxu0 0.0
    %243 = vmatprep.subr.mxu0 0.0
    %244 = vmatpush1.xpose.msra.mxu0 0.0
    %245 = vmatprep.subr.mxu0 0.0
    %246 = vmatpush1.xpose.msra.mxu0 0.0
    %247 = vmatprep.subr.mxu0 0.0
    %248 = vmatpush1.xpose.msra.mxu0 0.0
    %249 = vmatprep.subr.mxu0 0.0
    %250 = vmatpush1.xpose.msra.mxu0 0.0
    %251 = vmatprep.subr.mxu0 0.0
    %252 = vmatpush1.xpose.msra.mxu0 0.0
    %253 = vmatprep.subr.mxu0 0.0
    %254 = vmatpush1.xpose.msra.mxu0 0.0
    %255 = vmatprep.subr.mxu0 0.0
    %256 = vmatpush1.xpose.msra.mxu0 0.0
    %257 = vmatprep.subr.mxu0 0.0
    %v258 = vand.u32 %v73, 4294901760
    %v259 = vsub.f32 %v73, %v258
    %260 = vmatpush1.xpose.msra.mxu0 %v259
    %261 = vmatprep.subr.mxu0 0.0
    %262 = vmatpush2.xpose.msra.mxu0 0.0
    %263 = vmatprep.subr.mxu0 0.0
    %264 = vmatpush2.xpose.msra.mxu0 0.0
    %265 = vmatprep.subr.mxu0 0.0
    %266 = vmatpush2.xpose.msra.mxu0 0.0
    %267 = vmatprep.subr.mxu0 0.0
    %268 = vmatpush2.xpose.msra.mxu0 0.0
    %269 = vmatprep.subr.mxu0 0.0
    %270 = vmatpush2.xpose.msra.mxu0 0.0
    %271 = vmatprep.subr.mxu0 0.0
    %272 = vmatpush2.xpose.msra.mxu0 0.0
    %273 = vmatprep.subr.mxu0 0.0
    %274 = vmatpush2.xpose.msra.mxu0 0.0
    %275 = vmatprep.subr.mxu0 0.0
    %276 = vmatpush2.xpose.msra.mxu0 0.0
    %277 = vmatprep.subr.mxu0 0.0
    %278 = vmatpush2.xpose.msra.mxu0 0.0
    %279 = vmatprep.subr.mxu0 0.0
    %280 = vmatpush2.xpose.msra.mxu0 0.0
    %281 = vmatprep.subr.mxu0 0.0
    %282 = vmatpush2.xpose.msra.mxu0 0.0
    %283 = vmatprep.subr.mxu0 0.0
    %284 = vmatpush2.xpose.msra.mxu0 0.0
    %285 = vmatprep.subr.mxu0 0.0
    %286 = vmatpush2.xpose.msra.mxu0 0.0
    %287 = vmatprep.subr.mxu0 0.0
    %288 = vmatpush2.xpose.msra.mxu0 0.0
    %289 = vmatprep.subr.mxu0 0.0
    %290 = vmatpush2.xpose.msra.mxu0 0.0
    %291 = vmatprep.subr.mxu0 0.0
    %292 = vmatpush2.xpose.msra.mxu0 0.0
    %293 = vmatprep.mubr.f32.mxu0 0.0
    %v294 = vand.u32 %v70, 4294901760
    %v295 = vsub.f32 %v70, %v294
    %296 = vmatmul.mubr.f32.gmra.mxu0 %v295
    %v297 = vpop.f32.mrf.mxu0
    %v298 = vadd.f32 %v224, %v297
    %v299 = vpop.f32.mrf.mxu0
    %300 = vdwg.mxu0
    %301 = vmatprep.subr.mxu0 0.0
    %302 = vmatpush1.xpose.msra.mxu0 0.0
    %303 = vmatprep.subr.mxu0 0.0
    %304 = vmatpush1.xpose.msra.mxu0 0.0
    %305 = vmatprep.subr.mxu0 0.0
    %306 = vmatpush1.xpose.msra.mxu0 0.0
    %307 = vmatprep.subr.mxu0 0.0
    %308 = vmatpush1.xpose.msra.mxu0 0.0
    %309 = vmatprep.subr.mxu0 0.0
    %310 = vmatpush1.xpose.msra.mxu0 0.0
    %311 = vmatprep.subr.mxu0 0.0
    %312 = vmatpush1.xpose.msra.mxu0 0.0
    %313 = vmatprep.subr.mxu0 0.0
    %314 = vmatpush1.xpose.msra.mxu0 0.0
    %315 = vmatprep.subr.mxu0 0.0
    %316 = vmatpush1.xpose.msra.mxu0 0.0
    %317 = vmatprep.subr.mxu0 0.0
    %318 = vmatpush1.xpose.msra.mxu0 0.0
    %319 = vmatprep.subr.mxu0 0.0
    %320 = vmatpush1.xpose.msra.mxu0 0.0
    %321 = vmatprep.subr.mxu0 0.0
    %322 = vmatpush1.xpose.msra.mxu0 0.0
    %323 = vmatprep.subr.mxu0 0.0
    %324 = vmatpush1.xpose.msra.mxu0 0.0
    %325 = vmatprep.subr.mxu0 0.0
    %326 = vmatpush1.xpose.msra.mxu0 0.0
    %327 = vmatprep.subr.mxu0 0.0
    %328 = vmatpush1.xpose.msra.mxu0 0.0
    %329 = vmatprep.subr.mxu0 0.0
    %330 = vmatpush1.xpose.msra.mxu0 0.0
    %331 = vmatprep.subr.mxu0 0.0
    %v332 = vand.u32 %v73, 4294901760
    %333 = vmatpush1.xpose.msra.mxu0 %v332
    %334 = vmatprep.subr.mxu0 0.0
    %335 = vmatpush2.xpose.msra.mxu0 0.0
    %336 = vmatprep.subr.mxu0 0.0
    %337 = vmatpush2.xpose.msra.mxu0 0.0
    %338 = vmatprep.subr.mxu0 0.0
    %339 = vmatpush2.xpose.msra.mxu0 0.0
    %340 = vmatprep.subr.mxu0 0.0
    %341 = vmatpush2.xpose.msra.mxu0 0.0
    %342 = vmatprep.subr.mxu0 0.0
    %343 = vmatpush2.xpose.msra.mxu0 0.0
    %344 = vmatprep.subr.mxu0 0.0
    %345 = vmatpush2.xpose.msra.mxu0 0.0
    %346 = vmatprep.subr.mxu0 0.0
    %347 = vmatpush2.xpose.msra.mxu0 0.0
    %348 = vmatprep.subr.mxu0 0.0
    %349 = vmatpush2.xpose.msra.mxu0 0.0
    %350 = vmatprep.subr.mxu0 0.0
    %351 = vmatpush2.xpose.msra.mxu0 0.0
    %352 = vmatprep.subr.mxu0 0.0
    %353 = vmatpush2.xpose.msra.mxu0 0.0
    %354 = vmatprep.subr.mxu0 0.0
    %355 = vmatpush2.xpose.msra.mxu0 0.0
    %356 = vmatprep.subr.mxu0 0.0
    %357 = vmatpush2.xpose.msra.mxu0 0.0
    %358 = vmatprep.subr.mxu0 0.0
    %359 = vmatpush2.xpose.msra.mxu0 0.0
    %360 = vmatprep.subr.mxu0 0.0
    %361 = vmatpush2.xpose.msra.mxu0 0.0
    %362 = vmatprep.subr.mxu0 0.0
    %363 = vmatpush2.xpose.msra.mxu0 0.0
    %364 = vmatprep.subr.mxu0 0.0
    %365 = vmatpush2.xpose.msra.mxu0 0.0
    %366 = vmatprep.mubr.f32.mxu0 0.0
    %v367 = vand.u32 %v70, 4294901760
    %v368 = vsub.f32 %v70, %v367
    %v369 = vand.u32 %v368, 4294901760
    %370 = vmatmul.mubr.f32.gmra.mxu0 %v369
    %v371 = vpop.f32.mrf.mxu0
    %v372 = vadd.f32 %v298, %v371
    %v373 = vpop.f32.mrf.mxu0
    %374 = vdwg.mxu0
    %375 = vmatprep.subr.mxu0 0.0
    %376 = vmatpush1.xpose.msra.mxu0 0.0
    %377 = vmatprep.subr.mxu0 0.0
    %378 = vmatpush1.xpose.msra.mxu0 0.0
    %379 = vmatprep.subr.mxu0 0.0
    %380 = vmatpush1.xpose.msra.mxu0 0.0
    %381 = vmatprep.subr.mxu0 0.0
    %382 = vmatpush1.xpose.msra.mxu0 0.0
    %383 = vmatprep.subr.mxu0 0.0
    %384 = vmatpush1.xpose.msra.mxu0 0.0
    %385 = vmatprep.subr.mxu0 0.0
    %386 = vmatpush1.xpose.msra.mxu0 0.0
    %387 = vmatprep.subr.mxu0 0.0
    %388 = vmatpush1.xpose.msra.mxu0 0.0
    %389 = vmatprep.subr.mxu0 0.0
    %390 = vmatpush1.xpose.msra.mxu0 0.0
    %391 = vmatprep.subr.mxu0 0.0
    %392 = vmatpush1.xpose.msra.mxu0 0.0
    %393 = vmatprep.subr.mxu0 0.0
    %394 = vmatpush1.xpose.msra.mxu0 0.0
    %395 = vmatprep.subr.mxu0 0.0
    %396 = vmatpush1.xpose.msra.mxu0 0.0
    %397 = vmatprep.subr.mxu0 0.0
    %398 = vmatpush1.xpose.msra.mxu0 0.0
    %399 = vmatprep.subr.mxu0 0.0
    %400 = vmatpush1.xpose.msra.mxu0 0.0
    %401 = vmatprep.subr.mxu0 0.0
    %402 = vmatpush1.xpose.msra.mxu0 0.0
    %403 = vmatprep.subr.mxu0 0.0
    %404 = vmatpush1.xpose.msra.mxu0 0.0
    %405 = vmatprep.subr.mxu0 0.0
    %v406 = vand.u32 %v73, 4294901760
    %v407 = vsub.f32 %v73, %v406
    %v408 = vand.u32 %v407, 4294901760
    %409 = vmatpush1.xpose.msra.mxu0 %v408
    %410 = vmatprep.subr.mxu0 0.0
    %411 = vmatpush2.xpose.msra.mxu0 0.0
    %412 = vmatprep.subr.mxu0 0.0
    %413 = vmatpush2.xpose.msra.mxu0 0.0
    %414 = vmatprep.subr.mxu0 0.0
    %415 = vmatpush2.xpose.msra.mxu0 0.0
    %416 = vmatprep.subr.mxu0 0.0
    %417 = vmatpush2.xpose.msra.mxu0 0.0
    %418 = vmatprep.subr.mxu0 0.0
    %419 = vmatpush2.xpose.msra.mxu0 0.0
    %420 = vmatprep.subr.mxu0 0.0
    %421 = vmatpush2.xpose.msra.mxu0 0.0
    %422 = vmatprep.subr.mxu0 0.0
    %423 = vmatpush2.xpose.msra.mxu0 0.0
    %424 = vmatprep.subr.mxu0 0.0
    %425 = vmatpush2.xpose.msra.mxu0 0.0
    %426 = vmatprep.subr.mxu0 0.0
    %427 = vmatpush2.xpose.msra.mxu0 0.0
    %428 = vmatprep.subr.mxu0 0.0
    %429 = vmatpush2.xpose.msra.mxu0 0.0
    %430 = vmatprep.subr.mxu0 0.0
    %431 = vmatpush2.xpose.msra.mxu0 0.0
    %432 = vmatprep.subr.mxu0 0.0
    %433 = vmatpush2.xpose.msra.mxu0 0.0
    %434 = vmatprep.subr.mxu0 0.0
    %435 = vmatpush2.xpose.msra.mxu0 0.0
    %436 = vmatprep.subr.mxu0 0.0
    %437 = vmatpush2.xpose.msra.mxu0 0.0
    %438 = vmatprep.subr.mxu0 0.0
    %439 = vmatpush2.xpose.msra.mxu0 0.0
    %440 = vmatprep.subr.mxu0 0.0
    %441 = vmatpush2.xpose.msra.mxu0 0.0
    %442 = vmatprep.mubr.f32.mxu0 0.0
    %v443 = vand.u32 %v70, 4294901760
    %444 = vmatmul.mubr.f32.gmra.mxu0 %v443
    %v445 = vpop.f32.mrf.mxu0
    %v446 = vadd.f32 %v372, %v445
    %v447 = vpop.f32.mrf.mxu0
    %448 = vdwg.mxu0
    %449 = vmatprep.subr.mxu0 0.0
    %450 = vmatpush1.xpose.msra.mxu0 0.0
    %451 = vmatprep.subr.mxu0 0.0
    %452 = vmatpush1.xpose.msra.mxu0 0.0
    %453 = vmatprep.subr.mxu0 0.0
    %454 = vmatpush1.xpose.msra.mxu0 0.0
    %455 = vmatprep.subr.mxu0 0.0
    %456 = vmatpush1.xpose.msra.mxu0 0.0
    %457 = vmatprep.subr.mxu0 0.0
    %458 = vmatpush1.xpose.msra.mxu0 0.0
    %459 = vmatprep.subr.mxu0 0.0
    %460 = vmatpush1.xpose.msra.mxu0 0.0
    %461 = vmatprep.subr.mxu0 0.0
    %462 = vmatpush1.xpose.msra.mxu0 0.0
    %463 = vmatprep.subr.mxu0 0.0
    %464 = vmatpush1.xpose.msra.mxu0 0.0
    %465 = vmatprep.subr.mxu0 0.0
    %466 = vmatpush1.xpose.msra.mxu0 0.0
    %467 = vmatprep.subr.mxu0 0.0
    %468 = vmatpush1.xpose.msra.mxu0 0.0
    %469 = vmatprep.subr.mxu0 0.0
    %470 = vmatpush1.xpose.msra.mxu0 0.0
    %471 = vmatprep.subr.mxu0 0.0
    %472 = vmatpush1.xpose.msra.mxu0 0.0
    %473 = vmatprep.subr.mxu0 0.0
    %474 = vmatpush1.xpose.msra.mxu0 0.0
    %475 = vmatprep.subr.mxu0 0.0
    %476 = vmatpush1.xpose.msra.mxu0 0.0
    %477 = vmatprep.subr.mxu0 0.0
    %478 = vmatpush1.xpose.msra.mxu0 0.0
    %479 = vmatprep.subr.mxu0 0.0
    %v480 = vand.u32 %v73, 4294901760
    %481 = vmatpush1.xpose.msra.mxu0 %v480
    %482 = vmatprep.subr.mxu0 0.0
    %483 = vmatpush2.xpose.msra.mxu0 0.0
    %484 = vmatprep.subr.mxu0 0.0
    %485 = vmatpush2.xpose.msra.mxu0 0.0
    %486 = vmatprep.subr.mxu0 0.0
    %487 = vmatpush2.xpose.msra.mxu0 0.0
    %488 = vmatprep.subr.mxu0 0.0
    %489 = vmatpush2.xpose.msra.mxu0 0.0
    %490 = vmatprep.subr.mxu0 0.0
    %491 = vmatpush2.xpose.msra.mxu0 0.0
    %492 = vmatprep.subr.mxu0 0.0
    %493 = vmatpush2.xpose.msra.mxu0 0.0
    %494 = vmatprep.subr.mxu0 0.0
    %495 = vmatpush2.xpose.msra.mxu0 0.0
    %496 = vmatprep.subr.mxu0 0.0
    %497 = vmatpush2.xpose.msra.mxu0 0.0
    %498 = vmatprep.subr.mxu0 0.0
    %499 = vmatpush2.xpose.msra.mxu0 0.0
    %500 = vmatprep.subr.mxu0 0.0
    %501 = vmatpush2.xpose.msra.mxu0 0.0
    %502 = vmatprep.subr.mxu0 0.0
    %503 = vmatpush2.xpose.msra.mxu0 0.0
    %504 = vmatprep.subr.mxu0 0.0
    %505 = vmatpush2.xpose.msra.mxu0 0.0
    %506 = vmatprep.subr.mxu0 0.0
    %507 = vmatpush2.xpose.msra.mxu0 0.0
    %508 = vmatprep.subr.mxu0 0.0
    %509 = vmatpush2.xpose.msra.mxu0 0.0
    %510 = vmatprep.subr.mxu0 0.0
    %511 = vmatpush2.xpose.msra.mxu0 0.0
    %512 = vmatprep.subr.mxu0 0.0
    %513 = vmatpush2.xpose.msra.mxu0 0.0
    %514 = vmatprep.mubr.f32.mxu0 0.0
    %v515 = vand.u32 %v70, 4294901760
    %516 = vmatmul.mubr.f32.gmra.mxu0 %v515
    %v517 = vpop.f32.mrf.mxu0
    %v518 = vadd.f32 %v446, %v517
    %v519 = vpop.f32.mrf.mxu0
    %520 = vdwg.mxu0
    %v521 = vlaneseq
    %v522 = vshrl.u32 %v521, 7
    %v523 = vlaneseq
    %v524 = vand.u32 %v523, 127
    %vm525 = vcmp.eq.s32.totalorder %v522, %v524
    %v526 = vsel %vm525, %v518, 0.0
    %vm527 = vcmask 64512
    %v528 = vsel %vm527, %v526, 0.0
    %529 = vadd.xlane.f32.xlu0 %v528
    %v530 = vpop.xlane.xlu0 %529
    %v531 = vrot.slane %v528, 4
    %v532 = vadd.f32 %v528, %v531
    %v533 = vrot.slane %v532, 2
    %v534 = vadd.f32 %v532, %v533
    %v535 = vrot.slane %v534, 1
    %v536 = vadd.f32 %v534, %v535
    %v537 = vadd.f32 %v518, 0.2
    %v538 = vsub.f32 %v537, %v530
    %v539 = vmax.f32 %v538, 0.0
    %v540 = vsel %vm525, 0.0, %v539
    %v541 = vsel %vm527, %v540, 0.0
    %542 = vadd.xlane.f32.xlu0 %v541
    %v543 = vpop.xlane.xlu0 %542
    %v544 = vrot.slane %v543, 4
    %v545 = vadd.f32 %v543, %v544
    %v546 = vrot.slane %v545, 2
    %v547 = vadd.f32 %v545, %v546
    %v548 = vrot.slane %v547, 1
    %v549 = vadd.f32 %v547, %v548
    %s550 = vtos %v549
    %s551 = sadd.f32 %s550, 0.0
    %v552 = vsub.f32 %v537, %v536
    %v553 = vmax.f32 %v552, 0.0
    %v554 = vsel %vm525, 0.0, %v553
    %v555 = vsel %vm527, %v554, 0.0
    %556 = vadd.xlane.f32.xlu0 %v555
    %v557 = vpop.xlane.xlu0 %556
    %v558 = vrot.slane %v557, 4
    %v559 = vadd.f32 %v557, %v558
    %v560 = vrot.slane %v559, 2
    %v561 = vadd.f32 %v559, %v560
    %v562 = vrot.slane %v561, 1
    %v563 = vadd.f32 %v561, %v562
    %s564 = vtos %v563
    %s565 = sadd.f32 %s551, %s564
    %s566 = scalar_lea.smem [#allocation7], 0
    %567 = sst [smem:[%s566]] %s565
    // Predicated region
    $region18: #{tpu_custom_call.1} parent=1 // pred_check
      _
    $region19: #{tpu_custom_call.1} parent=1 // pred_check_branch
      %569 = sbr.rel (0) target = $region21
    $region20: #{tpu_custom_call.1} parent=1 // pred_region
      %s571 = ssub.s32 16, 16
      %572 = vsyncadd [#allocation4], %s571
      %575 = dma.smem_to_hbm [#allocation7], 16, %s2, [#allocation4]
    $region21: #{tpu_custom_call.1} parent=1 // pred_fallthru
      _
    // Predicated region
    $region22: #{tpu_custom_call.1} parent=1 // pred_check
      _
    $region23: #{tpu_custom_call.1} parent=1 // pred_check_branch
      %577 = sbr.rel (0) target = $region25
    $region24: #{tpu_custom_call.1} parent=1 // pred_region
      %578 = dma.done [#allocation4], 16
    $region25: #{tpu_custom_call.1} parent=1 // pred_fallthru
      _
    %579 = sfence
    %580 = vsyncpa [#allocation3], 1
    %581 = vsyncpa [#allocation6], 1
    %582 = vsyncpa [#allocation4], 1

</llo_original>
